<compile_context>
chip_gen: v7x
topology: tpu7x:2x2x1
jax: 0.10.0
libtpu: 0.0.40
codegen_flags: <defaults>
</compile_context>

<pallas_src>
import jax
import jax.numpy as jnp
from jax.experimental import pallas as pl
from jax.experimental.pallas import tpu as pltpu


def _round_up(x: int, m: int) -> int:
    return ((x + m - 1) // m) * m


# ---------------------------------------------------------------------------
# Pallas kernel: fused MLP forward (bf16 MXU, f32 accum) + in-kernel energy sum
# ---------------------------------------------------------------------------
def _mlp_energy_kernel(x_ref, w1_ref, b1_ref, w2_ref, b2_ref, y_ref, e_ref):
    # x arrives at its native dtype; cast to bf16 in-kernel (VPU has slack) to avoid a
    # separate, un-fused XLA cast pass over x in the wrapper.
    x = x_ref[...].astype(jnp.bfloat16)                                 # (TB, D_in)
    # layer 1: x @ W1 + b1, SiLU (f32 MXU accumulation, f32 activation math)
    h = jnp.dot(x, w1_ref[...], preferred_element_type=jnp.float32)     # (TB, H) f32
    h = h + b1_ref[...]                                                  # (1, H) broadcast
    h = h * jax.nn.sigmoid(h)                                            # SiLU in f32
    h_lo = h.astype(jnp.bfloat16)                                        # bf16 for dot #2
    # layer 2: h @ W2 + b2
    y = jnp.dot(h_lo, w2_ref[...], preferred_element_type=jnp.float32)   # (TB, D_out) f32
    y = y + b2_ref[...]
    y_lo = y.astype(y_ref.dtype)
    y_ref[...] = y_lo
    # per-sample energy = sum_j y[:, j]; kernel is HBM-bound so the XLU reduce is free
    # filler, and summing the *stored* (rounded) y keeps energy == sum(y) exactly.
    e = jnp.sum(y_lo.astype(jnp.float32), axis=-1, keepdims=True)        # (TB, 1)
    # NOTE: (TB, 1) is a masked store; <1% of traffic, kept for output-shape simplicity.
    e_ref[...] = e.astype(e_ref.dtype)


# ---------------------------------------------------------------------------
# Wrapper
# ---------------------------------------------------------------------------
def _choose_batch_tile(B: int, block_b: int) -> int:
    """Pick the batch tile: big enough to amortize ~0.35us/step grid overhead while,
    when possible, giving >= 2 grid steps so v7x's two TensorCores both get work."""
    if B > block_b:
        return block_b
    half = _round_up(pl.cdiv(B, 2), 256)
    if 256 <= half < B:
        return half                     # 2 grid steps
    return _round_up(B, 16)             # single step; 16 keeps bf16 sublane packing happy


def _vmem_limit_bytes(tb: int, d_in: int, h: int, d_out: int) -> int:
    # double-buffered streamed tiles + resident weights + working values + headroom
    tiles = 2 * (tb * d_in * 4 + tb * d_out * 2 + tb * 4)     # x f32, y bf16, e f32
    weights = (d_in * h + h * d_out) * 2 + (h + d_out) * 4     # bf16 W1/W2, f32 b1/b2
    work = tb * h * (4 + 2) + tb * d_out * 4                   # h f32 + h bf16 + y f32
    est = tiles + weights + work + (8 << 20)
    return int(min(max(est, 16 << 20), 48 << 20))              # fits v7x's 64 MiB VMEM


def mlp_energy_forward(x, w1_bf, b1_f, w2_bf, b2_f, *, block_b=4096,
                       y_dtype=jnp.bfloat16):
    B, D_in = x.shape
    H = w1_bf.shape[1]
    D_out = w2_bf.shape[1]

    block_b = max(256, _round_up(block_b, 256))
    TB = _choose_batch_tile(B, block_b)
    grid = (pl.cdiv(B, TB),)            # ragged last block handled by Pallas (no pad/slice)

    out_shapes = (
        jax.ShapeDtypeStruct((B, D_out), y_dtype),   # bf16 writeback (kernel is HBM-bound)
        jax.ShapeDtypeStruct((B, 1), jnp.float32),
    )

    # TODO(synk): if the real CACE feature/hidden dims grow enough that resident weights
    # stop fitting v7x VMEM, add a K-dim grid axis with an f32 accumulator (pl.when
    # init/finalize) instead of the index_map=(0,0) resident-weight scheme.
    y, e = pl.pallas_call(
        _mlp_energy_kernel,
        out_shape=out_shapes,
        grid_spec=pltpu.PrefetchScalarGridSpec(
            num_scalar_prefetch=0,
            grid=grid,
            in_specs=[
                pl.BlockSpec((TB, D_in), lambda i: (i, 0)),    # x: streamed per batch tile
                pl.BlockSpec((D_in, H), lambda i: (0, 0)),     # W1: VMEM-resident
                pl.BlockSpec((1, H), lambda i: (0, 0)),        # b1: VMEM-resident
                pl.BlockSpec((H, D_out), lambda i: (0, 0)),    # W2: VMEM-resident
                pl.BlockSpec((1, D_out), lambda i: (0, 0)),    # b2: VMEM-resident
            ],
            out_specs=(
                pl.BlockSpec((TB, D_out), lambda i: (i, 0)),
                pl.BlockSpec((TB, 1), lambda i: (i, 0)),
            ),
        ),
        compiler_params=pltpu.CompilerParams(
            dimension_semantics=("parallel",),
            vmem_limit_bytes=_vmem_limit_bytes(TB, D_in, H, D_out),
        ),
    )(x, w1_bf, b1_f, w2_bf, b2_f)
    return y, e


# ---------------------------------------------------------------------------
# JAX-side "TrainingTask": forward(data, training) -> model(data, training)
# ---------------------------------------------------------------------------
class SyntheticModel:
    """Deterministic stand-in for the wrapped nn.Module (atomistic energy model)."""

    def __init__(self, d_in=128, hidden=128, d_out=128, seed=0):
        k = jax.random.PRNGKey(seed)
        k1, k2, k3, k4 = jax.random.split(k, 4)
        scale1 = 1.0 / jnp.sqrt(jnp.float32(d_in))
        scale2 = 1.0 / jnp.sqrt(jnp.float32(hidden))
        self.w1 = jax.random.normal(k1, (d_in, hidden), jnp.float32) * scale1
        self.b1 = jax.random.normal(k2, (1, hidden), jnp.float32) * 0.01
        self.w2 = jax.random.normal(k3, (hidden, d_out), jnp.float32) * scale2
        self.b2 = jax.random.normal(k4, (1, d_out), jnp.float32) * 0.01
        # cache kernel-side parameter views once (no per-forward XLA cast pass)
        self.w1_bf = self.w1.astype(jnp.bfloat16)
        self.w2_bf = self.w2.astype(jnp.bfloat16)
        self.b1_f = self.b1.astype(jnp.float32)
        self.b2_f = self.b2.astype(jnp.float32)

    def __call__(self, data, training: bool = False):
        # `training` accepted for API parity; model is deterministic (no dropout).
        x = data["x"]
        y, energy = mlp_energy_forward(x, self.w1_bf, self.b1_f, self.w2_bf, self.b2_f)
        return {"y": y, "energy": energy}


class TrainingTask:
    """Forward-pass-only port of cace.tasks.train.TrainingTask."""

    def __init__(self, model):
        self.model = model
        # TODO(synk): losses / metrics / optimizer / scheduler / EMA / SWA / grad clipping /
        # checkpointing are training-loop bookkeeping with no forward-pass Pallas equivalent.

    def forward(self, data, training: bool):
        return self.model(data, training=training)


if __name__ == "__main__":
    B, D_IN, HIDDEN, D_OUT = 10, 128, 128, 128      # B=10 exercises the ragged last block
    key = jax.random.PRNGKey(0)
    x = jax.random.normal(key, (B, D_IN), jnp.float32)
    data = {"x": x}

    task = TrainingTask(SyntheticModel(D_IN, HIDDEN, D_OUT, seed=0))
    pred = task.forward(data, training=True)
    jax.block_until_ready(pred["y"])
    jax.block_until_ready(pred["energy"])

    # --- reference (bf16-matched, f32 accumulation) ---
    m = task.model
    x32 = x.astype(jnp.bfloat16).astype(jnp.float32)
    w1b = m.w1.astype(jnp.bfloat16).astype(jnp.float32)
    w2b = m.w2.astype(jnp.bfloat16).astype(jnp.float32)
    h_ref = x32 @ w1b + m.b1
    h_ref = h_ref * jax.nn.sigmoid(h_ref)
    h_ref = h_ref.astype(jnp.bfloat16).astype(jnp.float32)
    y_ref = h_ref @ w2b + m.b2

    y_out = pred["y"].astype(jnp.float32)
    assert pred["y"].shape == (B, D_OUT) and pred["y"].dtype == jnp.bfloat16
    assert pred["energy"].shape == (B, 1) and pred["energy"].dtype == jnp.float32
    assert jnp.allclose(y_out, y_ref, atol=3e-2, rtol=3e-2)
    # energy must equal the feature-sum of the stored y (computed from the same rounded values)
    e_from_y = jnp.sum(y_out, axis=-1, keepdims=True)
    assert jnp.allclose(pred["energy"], e_from_y, atol=2e-3, rtol=2e-3)

    print("KERNEL_OK")
</pallas_src>

<mosaic_0001>
module attributes {stable_mosaic.version = 11 : i64} {
  func.func @_mlp_energy_kernel(%arg0: i32, %arg1: memref<16x128xf32, #tpu.memory_space<vmem>>, %arg2: memref<128x128xbf16, #tpu.memory_space<vmem>>, %arg3: memref<1x128xf32, #tpu.memory_space<vmem>>, %arg4: memref<128x128xbf16, #tpu.memory_space<vmem>>, %arg5: memref<1x128xf32, #tpu.memory_space<vmem>>, %arg6: memref<16x128xbf16, #tpu.memory_space<vmem>>, %arg7: memref<16x1xf32, #tpu.memory_space<vmem>>) attributes {dimension_semantics = [#tpu.dimension_semantics<parallel>], iteration_bounds = array<i64: 1>, scalar_prefetch = 0 : i64, scratch_operands = 0 : i64, tpu.core_type = #tpu.core_type<tc>, window_params = [{transform_indices = @transform_0, window_bounds = array<i64: 16, 128>}, {pipeline_mode = #tpu.pipeline_mode<synchronous>, transform_indices = @transform_1, window_bounds = array<i64: 128, 128>}, {pipeline_mode = #tpu.pipeline_mode<synchronous>, transform_indices = @transform_2, window_bounds = array<i64: 1, 128>}, {pipeline_mode = #tpu.pipeline_mode<synchronous>, transform_indices = @transform_3, window_bounds = array<i64: 128, 128>}, {pipeline_mode = #tpu.pipeline_mode<synchronous>, transform_indices = @transform_4, window_bounds = array<i64: 1, 128>}, {transform_indices = @transform_5, window_bounds = array<i64: 16, 128>}, {transform_indices = @transform_6, window_bounds = array<i64: 16, 1>}]} {
    %c0 = arith.constant 0 : index
    %c0_0 = arith.constant 0 : index
    %0 = vector.load %arg1[%c0, %c0_0] : memref<16x128xf32, #tpu.memory_space<vmem>>, vector<16x128xf32>
    %1 = arith.truncf %0 : vector<16x128xf32> to vector<16x128xbf16>
    %c0_1 = arith.constant 0 : index
    %c0_2 = arith.constant 0 : index
    %2 = vector.load %arg2[%c0_1, %c0_2] : memref<128x128xbf16, #tpu.memory_space<vmem>>, vector<128x128xbf16>
    %cst = arith.constant dense<0.000000e+00> : vector<16x128xf32>
    %3 = tpu.matmul %1, %2, %cst {dimension_numbers = #tpu.dot_dimension_numbers<[1], [0], [0], [1], [0, 0, 1, 1], [], []>} : vector<16x128xbf16>, vector<128x128xbf16>, vector<16x128xf32> -> vector<16x128xf32>
    %c0_3 = arith.constant 0 : index
    %c0_4 = arith.constant 0 : index
    %4 = vector.load %arg3[%c0_3, %c0_4] : memref<1x128xf32, #tpu.memory_space<vmem>>, vector<1x128xf32>
    %5 = vector.broadcast %4 : vector<1x128xf32> to vector<16x128xf32>
    %6 = arith.addf %3, %5 : vector<16x128xf32>
    %7 = arith.negf %6 : vector<16x128xf32>
    %8 = math.exp %7 : vector<16x128xf32>
    %cst_5 = arith.constant 1.000000e+00 : f32
    %9 = vector.broadcast %cst_5 : f32 to vector<16x128xf32>
    %10 = arith.addf %9, %8 : vector<16x128xf32>
    %11 = arith.divf %9, %10 : vector<16x128xf32>
    %12 = arith.mulf %6, %11 : vector<16x128xf32>
    %13 = arith.truncf %12 : vector<16x128xf32> to vector<16x128xbf16>
    %c0_6 = arith.constant 0 : index
    %c0_7 = arith.constant 0 : index
    %14 = vector.load %arg4[%c0_6, %c0_7] : memref<128x128xbf16, #tpu.memory_space<vmem>>, vector<128x128xbf16>
    %cst_8 = arith.constant dense<0.000000e+00> : vector<16x128xf32>
    %15 = tpu.matmul %13, %14, %cst_8 {dimension_numbers = #tpu.dot_dimension_numbers<[1], [0], [0], [1], [0, 0, 1, 1], [], []>} : vector<16x128xbf16>, vector<128x128xbf16>, vector<16x128xf32> -> vector<16x128xf32>
    %c0_9 = arith.constant 0 : index
    %c0_10 = arith.constant 0 : index
    %16 = vector.load %arg5[%c0_9, %c0_10] : memref<1x128xf32, #tpu.memory_space<vmem>>, vector<1x128xf32>
    %17 = vector.broadcast %16 : vector<1x128xf32> to vector<16x128xf32>
    %18 = arith.addf %15, %17 : vector<16x128xf32>
    %19 = arith.truncf %18 : vector<16x128xf32> to vector<16x128xbf16>
    %c0_11 = arith.constant 0 : index
    %c0_12 = arith.constant 0 : index
    %20 = vector.load %arg6[%c0_11, %c0_12] : memref<16x128xbf16, #tpu.memory_space<vmem>>, vector<16x128xbf16>
    tpu.vector_store %arg6[%c0_11, %c0_12], %19 {strides = array<i32>} : memref<16x128xbf16, #tpu.memory_space<vmem>>, vector<16x128xbf16>,
    %21 = arith.extf %19 : vector<16x128xbf16> to vector<16x128xf32>
    %cst_13 = arith.constant dense<0.000000e+00> : vector<16xf32>
    %22 = vector.multi_reduction <add>, %21, %cst_13 [1] : vector<16x128xf32> to vector<16xf32>
    %23 = vector.shape_cast %22 : vector<16xf32> to vector<16x1xf32>
    %c0_14 = arith.constant 0 : index
    %c0_15 = arith.constant 0 : index
    %24 = vector.load %arg7[%c0_14, %c0_15] : memref<16x1xf32, #tpu.memory_space<vmem>>, vector<16x1xf32>
    tpu.vector_store %arg7[%c0_14, %c0_15], %23 {strides = array<i32>} : memref<16x1xf32, #tpu.memory_space<vmem>>, vector<16x1xf32>,
    return
  }
  func.func @transform_0(%arg0: i32) -> (i32, i32) {
    %c0_i32 = arith.constant 0 : i32
    %c0_i32_0 = arith.constant 0 : i32
    return %arg0, %c0_i32 : i32, i32
  }
  func.func @transform_1(%arg0: i32) -> (i32, i32) {
    %c0_i32 = arith.constant 0 : i32
    %c0_i32_0 = arith.constant 0 : i32
    %c0_i32_1 = arith.constant 0 : i32
    return %c0_i32, %c0_i32_0 : i32, i32
  }
  func.func @transform_2(%arg0: i32) -> (i32, i32) {
    %c0_i32 = arith.constant 0 : i32
    %c0_i32_0 = arith.constant 0 : i32
    %c0_i32_1 = arith.constant 0 : i32
    return %c0_i32, %c0_i32_0 : i32, i32
  }
  func.func @transform_3(%arg0: i32) -> (i32, i32) {
    %c0_i32 = arith.constant 0 : i32
    %c0_i32_0 = arith.constant 0 : i32
    %c0_i32_1 = arith.constant 0 : i32
    return %c0_i32, %c0_i32_0 : i32, i32
  }
  func.func @transform_4(%arg0: i32) -> (i32, i32) {
    %c0_i32 = arith.constant 0 : i32
    %c0_i32_0 = arith.constant 0 : i32
    %c0_i32_1 = arith.constant 0 : i32
    return %c0_i32, %c0_i32_0 : i32, i32
  }
  func.func @transform_5(%arg0: i32) -> (i32, i32) {
    %c0_i32 = arith.constant 0 : i32
    %c0_i32_0 = arith.constant 0 : i32
    return %arg0, %c0_i32 : i32, i32
  }
  func.func @transform_6(%arg0: i32) -> (i32, i32) {
    %c0_i32 = arith.constant 0 : i32
    %c0_i32_0 = arith.constant 0 : i32
    return %arg0, %c0_i32 : i32, i32
  }
}

</mosaic_0001>

<llo_original>
// kernel: tpu_custom_call.1
$region0: #{tpu_custom_call.1}
  #allocation0 [shape = 'u32[]', space=smem, size = 0x4, offset = 0x4, fixed_abs, tag = 'smem constant byte address 0x4 - core index']
  #allocation1 [shape = 'u32[144,128]{1,0:T(1,128)}', space=vmem, size = 0x12000, scoped, tag = 'internal scratch']
  %s0 = inlined_call_operand.hbm [shape: f32[10,128], index: 0, kind: input, shape index: {}]
  %s1 = inlined_call_operand.hbm [shape: bf16[128,128], index: 1, kind: input, shape index: {}]
  %s2 = inlined_call_operand.vmem [shape: f32[1,128], index: 2, kind: input, shape index: {}]
  %s3 = inlined_call_operand.hbm [shape: bf16[128,128], index: 3, kind: input, shape index: {}]
  %s4 = inlined_call_operand.vmem [shape: f32[1,128], index: 4, kind: input, shape index: {}]
  %s5 = inlined_call_operand.hbm [shape: bf16[10,128], index: 5, kind: output, shape index: {0}]
  %s6 = inlined_call_operand.vmem [shape: f32[10,1], index: 6, kind: output, shape index: {1}]
  %7 = xla_tuple %s5, %s6
  %s8 = sld [smem:[#allocation0]]
  $region50: #{tpu_custom_call.1} parent=0
    _
  %s10 = ssub.s32 1, %s8
  %s11 = scalar_select 0, %s10, %s8
  $region1: #{tpu_custom_call.1} parent=0
    #allocation2 [shape = 'u8[8192]{0}', space=vmem, size = 0x2000, scoped, tag = 'input window, operand 0, single buffered']
    #allocation3 [shape = 's32[1]{0}', space=sflag, size = 0x4, scoped, tag = 'scoped memory for tpu_custom_call.1']
    #allocation4 [shape = 's32[1]{0}', space=sflag, size = 0x4, scoped, tag = 'scoped memory for tpu_custom_call.1']
    #allocation5 [shape = 'u8[32768]{0}', space=vmem, size = 0x8000, scoped, tag = 'input window, operand 1, single buffered']
    #allocation6 [shape = 's32[1]{0}', space=sflag, size = 0x4, scoped, tag = 'scoped memory for tpu_custom_call.1']
    #allocation7 [shape = 'u8[32768]{0}', space=vmem, size = 0x8000, scoped, tag = 'input window, operand 3, single buffered']
    #allocation8 [shape = 'u8[4096]{0}', space=vmem, size = 0x1000, scoped, tag = 'output window, operand 0, single buffered']
    %12 = vsyncpa [#allocation3], 0
    %13 = vsyncpa [#allocation6], 0
    %14 = vsyncpa [#allocation4], 0
    // Predicated region
    $region2: #{tpu_custom_call.1} parent=1 // pred_check
      _
    $region3: #{tpu_custom_call.1} parent=1 // pred_check_branch
      %16 = sbr.rel (0) target = $region5
    $region4: #{tpu_custom_call.1} parent=1 // pred_region
      %s18 = ssub.s32 256, 256
      %19 = vsyncadd [#allocation3], %s18
      %s20 = sshll.u32 [#allocation2], 4
      %s21 = int_to_ptr.vmem [resolvable:$true] %s20
      %26 = dma.hbm_to_vmem [thread:$0]  %s0, 256, %s21, [#allocation3], 128, 128, 8
    $region5: #{tpu_custom_call.1} parent=1 // pred_fallthru
      _
    // Predicated region
    $region6: #{tpu_custom_call.1} parent=1 // pred_check
      _
    $region7: #{tpu_custom_call.1} parent=1 // pred_check_branch
      %28 = sbr.rel (0) target = $region9
    $region8: #{tpu_custom_call.1} parent=1 // pred_region
      %s30 = ssub.s32 1024, 1024
      %31 = vsyncadd [#allocation6], %s30
      %s32 = sshll.u32 [#allocation5], 4
      %s33 = int_to_ptr.vmem [resolvable:$true] %s32
      %38 = dma.hbm_to_vmem [thread:$0]  %s1, 1024, %s33, [#allocation6], 64, 64, 4
    $region9: #{tpu_custom_call.1} parent=1 // pred_fallthru
      _
    // Predicated region
    $region10: #{tpu_custom_call.1} parent=1 // pred_check
      _
    $region11: #{tpu_custom_call.1} parent=1 // pred_check_branch
      %40 = sbr.rel (0) target = $region13
    $region12: #{tpu_custom_call.1} parent=1 // pred_region
      _
    $region13: #{tpu_custom_call.1} parent=1 // pred_fallthru
      _
    // Predicated region
    $region14: #{tpu_custom_call.1} parent=1 // pred_check
      _
    $region15: #{tpu_custom_call.1} parent=1 // pred_check_branch
      %42 = sbr.rel (0) target = $region17
    $region16: #{tpu_custom_call.1} parent=1 // pred_region
      %s44 = ssub.s32 1024, 1024
      %45 = vsyncadd [#allocation6], %s44
      %s46 = sshll.u32 [#allocation7], 4
      %s47 = int_to_ptr.vmem [resolvable:$true] %s46
      %52 = dma.hbm_to_vmem [thread:$0]  %s3, 1024, %s47, [#allocation6], 64, 64, 4
    $region17: #{tpu_custom_call.1} parent=1 // pred_fallthru
      _
    // Predicated region
    $region18: #{tpu_custom_call.1} parent=1 // pred_check
      _
    $region19: #{tpu_custom_call.1} parent=1 // pred_check_branch
      %54 = sbr.rel (0) target = $region21
    $region20: #{tpu_custom_call.1} parent=1 // pred_region
      _
    $region21: #{tpu_custom_call.1} parent=1 // pred_fallthru
      _
    // Predicated region
    $region22: #{tpu_custom_call.1} parent=1 // pred_check
      _
    $region23: #{tpu_custom_call.1} parent=1 // pred_check_branch
      %56 = sbr.rel (0) target = $region25
    $region24: #{tpu_custom_call.1} parent=1 // pred_region
      %57 = dma.done [#allocation3], 256
    $region25: #{tpu_custom_call.1} parent=1 // pred_fallthru
      _
    // Predicated region
    $region26: #{tpu_custom_call.1} parent=1 // pred_check
      _
    $region27: #{tpu_custom_call.1} parent=1 // pred_check_branch
      %59 = sbr.rel (0) target = $region29
    $region28: #{tpu_custom_call.1} parent=1 // pred_region
      %60 = dma.done [#allocation6], 1024
    $region29: #{tpu_custom_call.1} parent=1 // pred_fallthru
      _
    // Predicated region
    $region30: #{tpu_custom_call.1} parent=1 // pred_check
      _
    $region31: #{tpu_custom_call.1} parent=1 // pred_check_branch
      %62 = sbr.rel (0) target = $region33
    $region32: #{tpu_custom_call.1} parent=1 // pred_region
      %63 = dma.done [#allocation6], 1024
    $region33: #{tpu_custom_call.1} parent=1 // pred_fallthru
      _
    %v65 = vld [vmem:[#allocation2] sm:$0xff]
    %v66 = vld [vmem:[#allocation2 + $0x8] sm:$0xff]
    %v67 = vpack.c.bf16 %v66, %v65
    %v68 = vld [vmem:[#allocation5] sm:$0xf]
    %v69 = vld [vmem:[#allocation5 + $0x4] sm:$0xf]
    %v70 = vld [vmem:[#allocation5 + $0x8] sm:$0xf]
    %v71 = vld [vmem:[#allocation5 + $0xc] sm:$0xf]
    %v72 = vld [vmem:[#allocation5 + $0x10] sm:$0xf]
    %v73 = vld [vmem:[#allocation5 + $0x14] sm:$0xf]
    %v74 = vld [vmem:[#allocation5 + $0x18] sm:$0xf]
    %v75 = vld [vmem:[#allocation5 + $0x1c] sm:$0xf]
    %v76 = vld [vmem:[#allocation5 + $0x20] sm:$0xf]
    %v77 = vld [vmem:[#allocation5 + $0x24] sm:$0xf]
    %v78 = vld [vmem:[#allocation5 + $0x28] sm:$0xf]
    %v79 = vld [vmem:[#allocation5 + $0x2c] sm:$0xf]
    %v80 = vld [vmem:[#allocation5 + $0x30] sm:$0xf]
    %v81 = vld [vmem:[#allocation5 + $0x34] sm:$0xf]
    %v82 = vld [vmem:[#allocation5 + $0x38] sm:$0xf]
    %v83 = vld [vmem:[#allocation5 + $0x3c] sm:$0xf]
    %v84 = vld [vmem:[%s2] sm:$0x1]
    %v86 = vlaneseq
    %v87 = vshrl.u32 %v86, 7
    %v88 = vsub.s32 0, %v87
    %v89 = vrot.slane %v84, %v88
    %v107 = vunpack.c.l.b16 %v68
    %v108 = vunpack.c.l.b16 %v69
    %v109 = vunpack.c.l.b16 %v70
    %v110 = vunpack.c.l.b16 %v71
    %v111 = vunpack.c.l.b16 %v72
    %v112 = vunpack.c.l.b16 %v73
    %v113 = vunpack.c.l.b16 %v74
    %v114 = vunpack.c.l.b16 %v75
    %v115 = vunpack.c.l.b16 %v76
    %v116 = vunpack.c.l.b16 %v77
    %v117 = vunpack.c.l.b16 %v78
    %v118 = vunpack.c.l.b16 %v79
    %v119 = vunpack.c.l.b16 %v80
    %v120 = vunpack.c.l.b16 %v81
    %v121 = vunpack.c.l.b16 %v82
    %v122 = vunpack.c.l.b16 %v83
    %v123 = vpack.c.b16 %v108, %v107
    %v124 = vpack.c.b16 %v110, %v109
    %v125 = vpack.c.b16 %v112, %v111
    %v126 = vpack.c.b16 %v114, %v113
    %v127 = vpack.c.b16 %v116, %v115
    %v128 = vpack.c.b16 %v118, %v117
    %v129 = vpack.c.b16 %v120, %v119
    %v130 = vpack.c.b16 %v122, %v121
    %139 = vmatprep.subr.bf16.mxu0 0
    %140 = vmatpush1.bf16.msra.mxu0 %v123
    %141 = vmatprep.subr.bf16.mxu0 0
    %142 = vmatpush1.bf16.msra.mxu0 %v124
    %143 = vmatprep.subr.bf16.mxu0 0
    %144 = vmatpush1.bf16.msra.mxu0 %v125
    %145 = vmatprep.subr.bf16.mxu0 0
    %146 = vmatpush1.bf16.msra.mxu0 %v126
    %147 = vmatprep.subr.bf16.mxu0 0
    %148 = vmatpush1.bf16.msra.mxu0 %v127
    %149 = vmatprep.subr.bf16.mxu0 0
    %150 = vmatpush1.bf16.msra.mxu0 %v128
    %151 = vmatprep.subr.bf16.mxu0 0
    %152 = vmatpush1.bf16.msra.mxu0 %v129
    %153 = vmatprep.subr.bf16.mxu0 0
    %154 = vmatpush1.bf16.msra.mxu0 %v130
    %155 = vmatprep.subr.bf16.mxu0 0
    %156 = vmatpush1.bf16.msra.mxu0 0
    %157 = vmatprep.subr.bf16.mxu0 0
    %158 = vmatpush1.bf16.msra.mxu0 0
    %159 = vmatprep.subr.bf16.mxu0 0
    %160 = vmatpush1.bf16.msra.mxu0 0
    %161 = vmatprep.subr.bf16.mxu0 0
    %162 = vmatpush1.bf16.msra.mxu0 0
    %163 = vmatprep.subr.bf16.mxu0 0
    %164 = vmatpush1.bf16.msra.mxu0 0
    %165 = vmatprep.subr.bf16.mxu0 0
    %166 = vmatpush1.bf16.msra.mxu0 0
    %167 = vmatprep.subr.bf16.mxu0 0
    %168 = vmatpush1.bf16.msra.mxu0 0
    %169 = vmatprep.subr.bf16.mxu0 0
    %170 = vmatpush1.bf16.msra.mxu0 0
    %171 = vmatprep.mubr.bf16.mxu0 0
    %172 = vmatmul.mubr.bf16.gmra.mrb[0].mxu0 %v67
    %v173 = vpop.f32.mrb[0].mxu0
    %v174 = vadd.f32 %v89, %v173
    %v175 = vpop.f32.mrb[0].mxu0
    %v176 = vpop.f32.mrb[0].mxu0
    %v177 = vadd.f32 %v89, %v176
    %v178 = vpop.f32.mrb[0].mxu0
    %179 = vdwg.mxu0
    %v180 = vxor.u32 %v174, 2147483648
    %v181 = vxor.u32 %v177, 2147483648
    %v182 = vmul.f32 %v180, 1.442695
    %v183 = vpow.pop %v182
    %v184 = vmul.f32 %v181, 1.442695
    %v185 = vpow.pop %v184
    %v186 = vadd.f32 %v183, 1.0
    %v187 = vadd.f32 %v185, 1.0
    %v188 = vrcp.pop %v186
    %v189 = vmul.f32 1.0, %v188
    %v190 = vrcp.pop %v187
    %v191 = vmul.f32 1.0, %v190
    %v192 = vmul.f32 %v174, %v189
    %v193 = vmul.f32 %v177, %v191
    %v194 = vpack.c.bf16 %v193, %v192
    %v195 = vld [vmem:[#allocation7] sm:$0xf]
    %v196 = vld [vmem:[#allocation7 + $0x4] sm:$0xf]
    %v197 = vld [vmem:[#allocation7 + $0x8] sm:$0xf]
    %v198 = vld [vmem:[#allocation7 + $0xc] sm:$0xf]
    %v199 = vld [vmem:[#allocation7 + $0x10] sm:$0xf]
    %v200 = vld [vmem:[#allocation7 + $0x14] sm:$0xf]
    %v201 = vld [vmem:[#allocation7 + $0x18] sm:$0xf]
    %v202 = vld [vmem:[#allocation7 + $0x1c] sm:$0xf]
    %v203 = vld [vmem:[#allocation7 + $0x20] sm:$0xf]
    %v204 = vld [vmem:[#allocation7 + $0x24] sm:$0xf]
    %v205 = vld [vmem:[#allocation7 + $0x28] sm:$0xf]
    %v206 = vld [vmem:[#allocation7 + $0x2c] sm:$0xf]
    %v207 = vld [vmem:[#allocation7 + $0x30] sm:$0xf]
    %v208 = vld [vmem:[#allocation7 + $0x34] sm:$0xf]
    %v209 = vld [vmem:[#allocation7 + $0x38] sm:$0xf]
    %v210 = vld [vmem:[#allocation7 + $0x3c] sm:$0xf]
    %v211 = vld [vmem:[%s4] sm:$0x1]
    %v213 = vlaneseq
    %v214 = vshrl.u32 %v213, 7
    %v215 = vsub.s32 0, %v214
    %v216 = vrot.slane %v211, %v215
    %v234 = vunpack.c.l.b16 %v195
    %v235 = vunpack.c.l.b16 %v196
    %v236 = vunpack.c.l.b16 %v197
    %v237 = vunpack.c.l.b16 %v198
    %v238 = vunpack.c.l.b16 %v199
    %v239 = vunpack.c.l.b16 %v200
    %v240 = vunpack.c.l.b16 %v201
    %v241 = vunpack.c.l.b16 %v202
    %v242 = vunpack.c.l.b16 %v203
    %v243 = vunpack.c.l.b16 %v204
    %v244 = vunpack.c.l.b16 %v205
    %v245 = vunpack.c.l.b16 %v206
    %v246 = vunpack.c.l.b16 %v207
    %v247 = vunpack.c.l.b16 %v208
    %v248 = vunpack.c.l.b16 %v209
    %v249 = vunpack.c.l.b16 %v210
    %v250 = vpack.c.b16 %v235, %v234
    %v251 = vpack.c.b16 %v237, %v236
    %v252 = vpack.c.b16 %v239, %v238
    %v253 = vpack.c.b16 %v241, %v240
    %v254 = vpack.c.b16 %v243, %v242
    %v255 = vpack.c.b16 %v245, %v244
    %v256 = vpack.c.b16 %v247, %v246
    %v257 = vpack.c.b16 %v249, %v248
    %266 = vmatprep.subr.bf16.mxu0 0
    %267 = vmatpush1.bf16.msra.mxu0 %v250
    %268 = vmatprep.subr.bf16.mxu0 0
    %269 = vmatpush1.bf16.msra.mxu0 %v251
    %270 = vmatprep.subr.bf16.mxu0 0
    %271 = vmatpush1.bf16.msra.mxu0 %v252
    %272 = vmatprep.subr.bf16.mxu0 0
    %273 = vmatpush1.bf16.msra.mxu0 %v253
    %274 = vmatprep.subr.bf16.mxu0 0
    %275 = vmatpush1.bf16.msra.mxu0 %v254
    %276 = vmatprep.subr.bf16.mxu0 0
    %277 = vmatpush1.bf16.msra.mxu0 %v255
    %278 = vmatprep.subr.bf16.mxu0 0
    %279 = vmatpush1.bf16.msra.mxu0 %v256
    %280 = vmatprep.subr.bf16.mxu0 0
    %281 = vmatpush1.bf16.msra.mxu0 %v257
    %282 = vmatprep.subr.bf16.mxu0 0
    %283 = vmatpush1.bf16.msra.mxu0 0
    %284 = vmatprep.subr.bf16.mxu0 0
    %285 = vmatpush1.bf16.msra.mxu0 0
    %286 = vmatprep.subr.bf16.mxu0 0
    %287 = vmatpush1.bf16.msra.mxu0 0
    %288 = vmatprep.subr.bf16.mxu0 0
    %289 = vmatpush1.bf16.msra.mxu0 0
    %290 = vmatprep.subr.bf16.mxu0 0
    %291 = vmatpush1.bf16.msra.mxu0 0
    %292 = vmatprep.subr.bf16.mxu0 0
    %293 = vmatpush1.bf16.msra.mxu0 0
    %294 = vmatprep.subr.bf16.mxu0 0
    %295 = vmatpush1.bf16.msra.mxu0 0
    %296 = vmatprep.subr.bf16.mxu0 0
    %297 = vmatpush1.bf16.msra.mxu0 0
    %298 = vmatprep.mubr.bf16.mxu0 0
    %299 = vmatmul.mubr.bf16.gmra.mrb[0].mxu0 %v194
    %v300 = vpop.f32.mrb[0].mxu0
    %v301 = vadd.f32 %v216, %v300
    %v302 = vpop.f32.mrb[0].mxu0
    %v303 = vpop.f32.mrb[0].mxu0
    %v304 = vadd.f32 %v216, %v303
    %v305 = vpop.f32.mrb[0].mxu0
    %306 = vdwg.mxu0
    %v307 = vpack.c.bf16 %v304, %v301
    %v309 = vunpack.c.l.b16 %v307
    %v310 = vunpack.c.h.b16 %v307
    %v311 = vpack.c.b16 %v309, %v309
    %v312 = vpack.c.b16 %v310, %v310
    %315 = vst [vmem:[#allocation8] sm:$0xf] %v311
    %316 = vst [vmem:[#allocation8 + $0x4] sm:$0xf] %v312
    %v317 = vunpack.c.l.bf16 %v307
    %v318 = vunpack.c.h.bf16 %v307
    %319 = vadd.xlane.f32.xlu0 %v317
    %v320 = vpop.xlane.xlu0 %319
    %321 = vadd.xlane.f32.xlu0 %v318
    %v322 = vpop.xlane.xlu0 %321
    %vm323 = vcmask 7168
    %324 = vst.msk [vmem:[%s6] sm:$0xff] %vm323, %v320
    %325 = vst.msk [vmem:[%s6 + $0x8] sm:$0xff] %vm323, %v322
    // Predicated region
    $region34: #{tpu_custom_call.1} parent=1 // pred_check
      _
    $region35: #{tpu_custom_call.1} parent=1 // pred_check_branch
      %327 = sbr.rel (0) target = $region37
    $region36: #{tpu_custom_call.1} parent=1 // pred_region
      %s329 = ssub.s32 128, 128
      %330 = vsyncadd [#allocation4], %s329
      %s331 = sshll.u32 [#allocation8], 4
      %s332 = int_to_ptr.vmem [resolvable:$true] %s331
      %337 = dma.vmem_to_hbm [thread:$0]  %s332, 128, %s5, [#allocation4], 64, 64, 4
    $region37: #{tpu_custom_call.1} parent=1 // pred_fallthru
      _
    // Predicated region
    $region38: #{tpu_custom_call.1} parent=1 // pred_check
      _
    $region39: #{tpu_custom_call.1} parent=1 // pred_check_branch
      %339 = sbr.rel (0) target = $region41
    $region40: #{tpu_custom_call.1} parent=1 // pred_region
      _
    $region41: #{tpu_custom_call.1} parent=1 // pred_fallthru
      _
    // Predicated region
    $region42: #{tpu_custom_call.1} parent=1 // pred_check
      _
    $region43: #{tpu_custom_call.1} parent=1 // pred_check_branch
      %341 = sbr.rel (0) target = $region45
    $region44: #{tpu_custom_call.1} parent=1 // pred_region
      %342 = dma.done [#allocation4], 128
    $region45: #{tpu_custom_call.1} parent=1 // pred_fallthru
      _
    // Predicated region
    $region46: #{tpu_custom_call.1} parent=1 // pred_check
      _
    $region47: #{tpu_custom_call.1} parent=1 // pred_check_branch
      %344 = sbr.rel (0) target = $region49
    $region48: #{tpu_custom_call.1} parent=1 // pred_region
      _
    $region49: #{tpu_custom_call.1} parent=1 // pred_fallthru
      _
    %345 = vsyncpa [#allocation3], 1
    %346 = vsyncpa [#allocation6], 1
    %347 = vsyncpa [#allocation4], 1

</llo_original>
